<compile_context>
chip_gen: v7x
topology: tpu7x:2x2x1
jax: 0.10.0
libtpu: 0.0.40
codegen_flags: <defaults>
</compile_context>

<pallas_src>
import jax
import jax.numpy as jnp
from jax.experimental import pallas as pl
from jax.experimental.pallas import tpu as pltpu

_LANE = 128
_VMEM_CAP = 40 << 20  # bytes; fits v7x's 64 MiB physical VMEM with headroom.


def _round_up(x, m):
    return ((x + m - 1) // m) * m


def _pad_to(a, shape):
    pads = [(0, t - s) for s, t in zip(a.shape, shape)]
    if all(p == (0, 0) for p in pads):
        return a
    return jnp.pad(a, pads)


def mlp3_kernel(x_ref, w1_ref, b1_ref, w2_ref, b2_ref,
                w3_ref, b3_ref, w4_ref, b4_ref, o_ref):
    # x is DMA'd as f32 and cast to bf16 here (VPU slack) instead of in the
    # wrapper: halves x-side HBM traffic and removes one XLA launch.
    x = x_ref[...].astype(jnp.bfloat16)
    # fc1 + relu  (bf16 operands, f32 accumulate; bias/ReLU in f32)
    h = jnp.dot(x, w1_ref[...], preferred_element_type=jnp.float32)
    h = jnp.maximum(h + b1_ref[...], 0.0)
    # fc2 + relu
    h = jnp.dot(h.astype(jnp.bfloat16), w2_ref[...],
                preferred_element_type=jnp.float32)
    h = jnp.maximum(h + b2_ref[...], 0.0)
    # fc3 + relu
    h = jnp.dot(h.astype(jnp.bfloat16), w3_ref[...],
                preferred_element_type=jnp.float32)
    h = jnp.maximum(h + b3_ref[...], 0.0)
    # fc4 (no activation)
    h = jnp.dot(h.astype(jnp.bfloat16), w4_ref[...],
                preferred_element_type=jnp.float32)
    o_ref[...] = (h + b4_ref[...]).astype(o_ref.dtype)


def _vmem_budget_bytes(tb, f, h1p, h2p, h3p, n_label):
    """VMEM estimate including 128-lane padding of the streamed blocks and the
    live (TB, 128) intermediate activations."""
    f32, bf16 = 4, 2
    fl = _round_up(f, _LANE)        # x block lane-pads to 128 in VMEM
    ll = _round_up(n_label, _LANE)  # out block lane-pads to 128 in VMEM
    stream = 2 * tb * fl * f32 + 2 * tb * ll * f32               # dbl-buffered x / out
    params = 2 * bf16 * (fl * h1p + h1p * h2p + h2p * h3p + h3p * ll)
    params += 2 * f32 * 8 * (h1p + h2p + h3p + ll)               # sublane-padded biases
    widest = max(h1p, h2p, h3p, ll)
    acts = 4 * tb * widest * (f32 + bf16)                        # live intermediates (generous)
    return int(1.25 * (stream + params + acts)) + (2 << 20)


def mlp3_forward(x, params, *, block_b=4096):
    """x: [B, F] float32; params: w1..w4 ([in,out]) and b1..b4 ([1,out])."""
    B, F = x.shape
    H1 = params["w1"].shape[1]
    H2 = params["w2"].shape[1]
    H3 = params["w3"].shape[1]
    L = params["w4"].shape[1]

    # Lane-padded hidden widths (zeros stay zero through ReLU; W4's padded
    # rows are zero, so the final result is exact).
    H1p = _round_up(H1, _LANE)
    H2p = _round_up(H2, _LANE)
    H3p = _round_up(H3, _LANE)

    # Batch tile: multiple of 8 (sublane), capped at block_b and at the batch.
    TB = min(_round_up(block_b, 8), _round_up(B, 8))
    # Shrink until the VMEM estimate fits the cross-generation budget.
    while TB > 8 and _vmem_budget_bytes(TB, F, H1p, H2p, H3p, L) > _VMEM_CAP:
        TB = max(8, _round_up(TB // 2, 8))
    Bp = _round_up(B, TB)
    # Keep >= 2 grid steps when possible so the "parallel" batch axis can
    # shard across v7x's two TensorCores (grid of 1 leaves one TC idle).
    if Bp // TB == 1 and TB >= 16:
        TB = max(8, _round_up(TB // 2, 8))
        Bp = _round_up(B, TB)

    # x stays in its native dtype/precision; pad the batch only if needed.
    xp = x if Bp == B else jnp.pad(x, ((0, Bp - B), (0, 0)))

    # Weights: zero-pad hidden dims to 128 lanes, cast to bf16 (single-pass
    # MXU, half the DMA bytes). Biases stay f32 ([1, padded_out]).
    w1 = _pad_to(params["w1"], (F, H1p)).astype(jnp.bfloat16)
    w2 = _pad_to(params["w2"], (H1p, H2p)).astype(jnp.bfloat16)
    w3 = _pad_to(params["w3"], (H2p, H3p)).astype(jnp.bfloat16)
    w4 = _pad_to(params["w4"], (H3p, L)).astype(jnp.bfloat16)
    b1 = _pad_to(params["b1"], (1, H1p)).astype(jnp.float32)
    b2 = _pad_to(params["b2"], (1, H2p)).astype(jnp.float32)
    b3 = _pad_to(params["b3"], (1, H3p)).astype(jnp.float32)
    b4 = params["b4"].astype(jnp.float32)

    def const_spec(a):
        # Full-array block, same block index every grid step -> VMEM-resident.
        return pl.BlockSpec(a.shape, lambda i: (0,) * a.ndim)

    grid = (Bp // TB,)
    in_specs = [
        pl.BlockSpec((TB, F), lambda i: (i, 0)),   # x streams over batch
        const_spec(w1), const_spec(b1),
        const_spec(w2), const_spec(b2),
        const_spec(w3), const_spec(b3),
        const_spec(w4), const_spec(b4),
    ]
    out_specs = pl.BlockSpec((TB, L), lambda i: (i, 0))

    flops = 2 * Bp * (F * H1p + H1p * H2p + H2p * H3p + H3p * L)
    param_bytes = 2 * (F * H1p + H1p * H2p + H2p * H3p + H3p * L) \
        + 4 * (H1p + H2p + H3p + L)
    bytes_accessed = Bp * F * 4 + Bp * L * 4 + param_bytes

    out = pl.pallas_call(
        mlp3_kernel,
        out_shape=jax.ShapeDtypeStruct((Bp, L), jnp.float32),
        grid=grid,
        in_specs=in_specs,
        out_specs=out_specs,
        compiler_params=pltpu.CompilerParams(
            dimension_semantics=("parallel",),
            vmem_limit_bytes=_VMEM_CAP,
        ),
        cost_estimate=pl.CostEstimate(
            flops=flops, transcendentals=0, bytes_accessed=bytes_accessed),
    )(xp, w1, b1, w2, b2, w3, b3, w4, b4)

    return out[:B] if Bp != B else out


def init_params(key, n_feature, h1, h2, h3, n_label):
    """Deterministic init mimicking nn.Linear default (uniform +/-1/sqrt(fan_in))."""
    dims = [(n_feature, h1), (h1, h2), (h2, h3), (h3, n_label)]
    params = {}
    keys = jax.random.split(key, 2 * len(dims))
    for i, (fan_in, fan_out) in enumerate(dims):
        bound = 1.0 / jnp.sqrt(jnp.float32(fan_in))
        w = jax.random.uniform(keys[2 * i], (fan_in, fan_out),
                               minval=-bound, maxval=bound, dtype=jnp.float32)
        b = jax.random.uniform(keys[2 * i + 1], (1, fan_out),
                               minval=-bound, maxval=bound, dtype=jnp.float32)
        params[f"w{i + 1}"] = w
        params[f"b{i + 1}"] = b
    return params


def _reference(x, params):
    """Plain-JAX reference using the same bf16-operand / f32-accumulate math."""
    bf = jnp.bfloat16
    h = x.astype(bf)
    h = jnp.dot(h, params["w1"].astype(bf), preferred_element_type=jnp.float32)
    h = jnp.maximum(h + params["b1"], 0.0)
    h = jnp.dot(h.astype(bf), params["w2"].astype(bf),
                preferred_element_type=jnp.float32)
    h = jnp.maximum(h + params["b2"], 0.0)
    h = jnp.dot(h.astype(bf), params["w3"].astype(bf),
                preferred_element_type=jnp.float32)
    h = jnp.maximum(h + params["b3"], 0.0)
    h = jnp.dot(h.astype(bf), params["w4"].astype(bf),
                preferred_element_type=jnp.float32)
    return h + params["b4"]


if __name__ == "__main__":
    # Small shapes consistent with the module:
    # NumOfFeature=32, H1=64, H2=48, H3=32, NumOfLabel=16, batch=8
    B, F, H1, H2, H3, L = 8, 32, 64, 48, 32, 16

    key = jax.random.PRNGKey(0)
    kx, kp, kx2 = jax.random.split(key, 3)
    x = jax.random.normal(kx, (B, F), dtype=jnp.float32)
    params = init_params(kp, F, H1, H2, H3, L)

    out = jax.block_until_ready(mlp3_forward(x, params))
    ref = _reference(x, params)
    assert out.shape == (B, L)
    assert jnp.allclose(out, ref, atol=1e-2, rtol=1e-2)

    # Also exercise batch padding + a multi-step grid (B=13 -> TB=8, 2 steps).
    x2 = jax.random.normal(kx2, (13, F), dtype=jnp.float32)
    out2 = jax.block_until_ready(mlp3_forward(x2, params))
    ref2 = _reference(x2, params)
    assert out2.shape == (13, L)
    assert jnp.allclose(out2, ref2, atol=1e-2, rtol=1e-2)

    print("KERNEL_OK")
</pallas_src>

<mosaic_0001>
module attributes {stable_mosaic.version = 11 : i64} {
  func.func @mlp3_kernel(%arg0: i32, %arg1: memref<8x32xf32, #tpu.memory_space<vmem>>, %arg2: memref<32x128xbf16, #tpu.memory_space<vmem>>, %arg3: memref<1x128xf32, #tpu.memory_space<vmem>>, %arg4: memref<128x128xbf16, #tpu.memory_space<vmem>>, %arg5: memref<1x128xf32, #tpu.memory_space<vmem>>, %arg6: memref<128x128xbf16, #tpu.memory_space<vmem>>, %arg7: memref<1x128xf32, #tpu.memory_space<vmem>>, %arg8: memref<128x16xbf16, #tpu.memory_space<vmem>>, %arg9: memref<1x16xf32, #tpu.memory_space<vmem>>, %arg10: memref<8x16xf32, #tpu.memory_space<vmem>>) attributes {dimension_semantics = [#tpu.dimension_semantics<parallel>], iteration_bounds = array<i64: 1>, scalar_prefetch = 0 : i64, scratch_operands = 0 : i64, tpu.core_type = #tpu.core_type<tc>, window_params = [{transform_indices = @transform_0, window_bounds = array<i64: 8, 32>}, {pipeline_mode = #tpu.pipeline_mode<synchronous>, transform_indices = @transform_1, window_bounds = array<i64: 32, 128>}, {pipeline_mode = #tpu.pipeline_mode<synchronous>, transform_indices = @transform_2, window_bounds = array<i64: 1, 128>}, {pipeline_mode = #tpu.pipeline_mode<synchronous>, transform_indices = @transform_3, window_bounds = array<i64: 128, 128>}, {pipeline_mode = #tpu.pipeline_mode<synchronous>, transform_indices = @transform_4, window_bounds = array<i64: 1, 128>}, {pipeline_mode = #tpu.pipeline_mode<synchronous>, transform_indices = @transform_5, window_bounds = array<i64: 128, 128>}, {pipeline_mode = #tpu.pipeline_mode<synchronous>, transform_indices = @transform_6, window_bounds = array<i64: 1, 128>}, {pipeline_mode = #tpu.pipeline_mode<synchronous>, transform_indices = @transform_7, window_bounds = array<i64: 128, 16>}, {pipeline_mode = #tpu.pipeline_mode<synchronous>, transform_indices = @transform_8, window_bounds = array<i64: 1, 16>}, {transform_indices = @transform_9, window_bounds = array<i64: 8, 16>}]} {
    %c0 = arith.constant 0 : index
    %c0_0 = arith.constant 0 : index
    %0 = vector.load %arg1[%c0, %c0_0] : memref<8x32xf32, #tpu.memory_space<vmem>>, vector<8x32xf32>
    %1 = arith.truncf %0 : vector<8x32xf32> to vector<8x32xbf16>
    %c0_1 = arith.constant 0 : index
    %c0_2 = arith.constant 0 : index
    %2 = vector.load %arg2[%c0_1, %c0_2] : memref<32x128xbf16, #tpu.memory_space<vmem>>, vector<32x128xbf16>
    %cst = arith.constant dense<0.000000e+00> : vector<8x128xf32>
    %3 = tpu.matmul %1, %2, %cst {dimension_numbers = #tpu.dot_dimension_numbers<[1], [0], [0], [1], [0, 0, 1, 1], [], []>} : vector<8x32xbf16>, vector<32x128xbf16>, vector<8x128xf32> -> vector<8x128xf32>
    %c0_3 = arith.constant 0 : index
    %c0_4 = arith.constant 0 : index
    %4 = vector.load %arg3[%c0_3, %c0_4] : memref<1x128xf32, #tpu.memory_space<vmem>>, vector<1x128xf32>
    %5 = vector.broadcast %4 : vector<1x128xf32> to vector<8x128xf32>
    %6 = arith.addf %3, %5 : vector<8x128xf32>
    %cst_5 = arith.constant 0.000000e+00 : f32
    %7 = vector.broadcast %cst_5 : f32 to vector<8x128xf32>
    %8 = arith.maximumf %6, %7 : vector<8x128xf32>
    %9 = arith.truncf %8 : vector<8x128xf32> to vector<8x128xbf16>
    %c0_6 = arith.constant 0 : index
    %c0_7 = arith.constant 0 : index
    %10 = vector.load %arg4[%c0_6, %c0_7] : memref<128x128xbf16, #tpu.memory_space<vmem>>, vector<128x128xbf16>
    %cst_8 = arith.constant dense<0.000000e+00> : vector<8x128xf32>
    %11 = tpu.matmul %9, %10, %cst_8 {dimension_numbers = #tpu.dot_dimension_numbers<[1], [0], [0], [1], [0, 0, 1, 1], [], []>} : vector<8x128xbf16>, vector<128x128xbf16>, vector<8x128xf32> -> vector<8x128xf32>
    %c0_9 = arith.constant 0 : index
    %c0_10 = arith.constant 0 : index
    %12 = vector.load %arg5[%c0_9, %c0_10] : memref<1x128xf32, #tpu.memory_space<vmem>>, vector<1x128xf32>
    %13 = vector.broadcast %12 : vector<1x128xf32> to vector<8x128xf32>
    %14 = arith.addf %11, %13 : vector<8x128xf32>
    %cst_11 = arith.constant 0.000000e+00 : f32
    %15 = vector.broadcast %cst_11 : f32 to vector<8x128xf32>
    %16 = arith.maximumf %14, %15 : vector<8x128xf32>
    %17 = arith.truncf %16 : vector<8x128xf32> to vector<8x128xbf16>
    %c0_12 = arith.constant 0 : index
    %c0_13 = arith.constant 0 : index
    %18 = vector.load %arg6[%c0_12, %c0_13] : memref<128x128xbf16, #tpu.memory_space<vmem>>, vector<128x128xbf16>
    %cst_14 = arith.constant dense<0.000000e+00> : vector<8x128xf32>
    %19 = tpu.matmul %17, %18, %cst_14 {dimension_numbers = #tpu.dot_dimension_numbers<[1], [0], [0], [1], [0, 0, 1, 1], [], []>} : vector<8x128xbf16>, vector<128x128xbf16>, vector<8x128xf32> -> vector<8x128xf32>
    %c0_15 = arith.constant 0 : index
    %c0_16 = arith.constant 0 : index
    %20 = vector.load %arg7[%c0_15, %c0_16] : memref<1x128xf32, #tpu.memory_space<vmem>>, vector<1x128xf32>
    %21 = vector.broadcast %20 : vector<1x128xf32> to vector<8x128xf32>
    %22 = arith.addf %19, %21 : vector<8x128xf32>
    %cst_17 = arith.constant 0.000000e+00 : f32
    %23 = vector.broadcast %cst_17 : f32 to vector<8x128xf32>
    %24 = arith.maximumf %22, %23 : vector<8x128xf32>
    %25 = arith.truncf %24 : vector<8x128xf32> to vector<8x128xbf16>
    %c0_18 = arith.constant 0 : index
    %c0_19 = arith.constant 0 : index
    %26 = vector.load %arg8[%c0_18, %c0_19] : memref<128x16xbf16, #tpu.memory_space<vmem>>, vector<128x16xbf16>
    %cst_20 = arith.constant dense<0.000000e+00> : vector<8x16xf32>
    %27 = tpu.matmul %25, %26, %cst_20 {dimension_numbers = #tpu.dot_dimension_numbers<[1], [0], [0], [1], [0, 0, 1, 1], [], []>} : vector<8x128xbf16>, vector<128x16xbf16>, vector<8x16xf32> -> vector<8x16xf32>
    %c0_21 = arith.constant 0 : index
    %c0_22 = arith.constant 0 : index
    %28 = vector.load %arg9[%c0_21, %c0_22] : memref<1x16xf32, #tpu.memory_space<vmem>>, vector<1x16xf32>
    %29 = vector.broadcast %28 : vector<1x16xf32> to vector<8x16xf32>
    %30 = arith.addf %27, %29 : vector<8x16xf32>
    %c0_23 = arith.constant 0 : index
    %c0_24 = arith.constant 0 : index
    %31 = vector.load %arg10[%c0_23, %c0_24] : memref<8x16xf32, #tpu.memory_space<vmem>>, vector<8x16xf32>
    tpu.vector_store %arg10[%c0_23, %c0_24], %30 {strides = array<i32>} : memref<8x16xf32, #tpu.memory_space<vmem>>, vector<8x16xf32>,
    return
  }
  func.func @transform_0(%arg0: i32) -> (i32, i32) {
    %c0_i32 = arith.constant 0 : i32
    %c0_i32_0 = arith.constant 0 : i32
    return %arg0, %c0_i32 : i32, i32
  }
  func.func @transform_1(%arg0: i32) -> (i32, i32) {
    %c0_i32 = arith.constant 0 : i32
    %c0_i32_0 = arith.constant 0 : i32
    %c0_i32_1 = arith.constant 0 : i32
    return %c0_i32, %c0_i32_0 : i32, i32
  }
  func.func @transform_2(%arg0: i32) -> (i32, i32) {
    %c0_i32 = arith.constant 0 : i32
    %c0_i32_0 = arith.constant 0 : i32
    %c0_i32_1 = arith.constant 0 : i32
    return %c0_i32, %c0_i32_0 : i32, i32
  }
  func.func @transform_3(%arg0: i32) -> (i32, i32) {
    %c0_i32 = arith.constant 0 : i32
    %c0_i32_0 = arith.constant 0 : i32
    %c0_i32_1 = arith.constant 0 : i32
    return %c0_i32, %c0_i32_0 : i32, i32
  }
  func.func @transform_4(%arg0: i32) -> (i32, i32) {
    %c0_i32 = arith.constant 0 : i32
    %c0_i32_0 = arith.constant 0 : i32
    %c0_i32_1 = arith.constant 0 : i32
    return %c0_i32, %c0_i32_0 : i32, i32
  }
  func.func @transform_5(%arg0: i32) -> (i32, i32) {
    %c0_i32 = arith.constant 0 : i32
    %c0_i32_0 = arith.constant 0 : i32
    %c0_i32_1 = arith.constant 0 : i32
    return %c0_i32, %c0_i32_0 : i32, i32
  }
  func.func @transform_6(%arg0: i32) -> (i32, i32) {
    %c0_i32 = arith.constant 0 : i32
    %c0_i32_0 = arith.constant 0 : i32
    %c0_i32_1 = arith.constant 0 : i32
    return %c0_i32, %c0_i32_0 : i32, i32
  }
  func.func @transform_7(%arg0: i32) -> (i32, i32) {
    %c0_i32 = arith.constant 0 : i32
    %c0_i32_0 = arith.constant 0 : i32
    %c0_i32_1 = arith.constant 0 : i32
    return %c0_i32, %c0_i32_0 : i32, i32
  }
  func.func @transform_8(%arg0: i32) -> (i32, i32) {
    %c0_i32 = arith.constant 0 : i32
    %c0_i32_0 = arith.constant 0 : i32
    %c0_i32_1 = arith.constant 0 : i32
    return %c0_i32, %c0_i32_0 : i32, i32
  }
  func.func @transform_9(%arg0: i32) -> (i32, i32) {
    %c0_i32 = arith.constant 0 : i32
    %c0_i32_0 = arith.constant 0 : i32
    return %arg0, %c0_i32 : i32, i32
  }
}

</mosaic_0001>

<llo_original>
// kernel: tpu_custom_call.1
$region0: #{tpu_custom_call.1}
  #allocation0 [shape = 'u32[]', space=smem, size = 0x4, offset = 0x4, fixed_abs, tag = 'smem constant byte address 0x4 - core index']
  #allocation1 [shape = 'u32[144,128]{1,0:T(1,128)}', space=vmem, size = 0x12000, scoped, tag = 'internal scratch']
  %s0 = inlined_call_operand.hbm [shape: f32[8,32], index: 0, kind: input, shape index: {}]
  %s1 = inlined_call_operand.vmem [shape: bf16[32,128], index: 1, kind: input, shape index: {}]
  %s2 = inlined_call_operand.vmem [shape: f32[1,128], index: 2, kind: input, shape index: {}]
  %s3 = inlined_call_operand.vmem [shape: bf16[128,128], index: 3, kind: input, shape index: {}]
  %s4 = inlined_call_operand.vmem [shape: f32[1,128], index: 4, kind: input, shape index: {}]
  %s5 = inlined_call_operand.hbm [shape: bf16[128,128], index: 5, kind: input, shape index: {}]
  %s6 = inlined_call_operand.vmem [shape: f32[1,128], index: 6, kind: input, shape index: {}]
  %s7 = inlined_call_operand.vmem [shape: bf16[128,16], index: 7, kind: input, shape index: {}]
  %s8 = inlined_call_operand.vmem [shape: f32[1,16], index: 8, kind: input, shape index: {}]
  %s9 = inlined_call_operand.hbm [shape: f32[8,16], index: 9, kind: output, shape index: {}]
  %s10 = sld [smem:[#allocation0]]
  $region54: #{tpu_custom_call.1} parent=0
    _
  %s12 = ssub.s32 1, %s10
  %s13 = scalar_select 0, %s12, %s10
  $region1: #{tpu_custom_call.1} parent=0
    #allocation2 [shape = 'u8[4096]{0}', space=vmem, size = 0x1000, scoped, tag = 'input window, operand 0, single buffered']
    #allocation3 [shape = 's32[1]{0}', space=sflag, size = 0x4, scoped, tag = 'scoped memory for tpu_custom_call.1']
    #allocation4 [shape = 's32[1]{0}', space=sflag, size = 0x4, scoped, tag = 'scoped memory for tpu_custom_call.1']
    #allocation5 [shape = 'u8[32768]{0}', space=vmem, size = 0x8000, scoped, tag = 'input window, operand 5, single buffered']
    #allocation6 [shape = 's32[1]{0}', space=sflag, size = 0x4, scoped, tag = 'scoped memory for tpu_custom_call.1']
    #allocation7 [shape = 'u8[4096]{0}', space=vmem, size = 0x1000, scoped, tag = 'output window, operand 0, single buffered']
    %14 = vsyncpa [#allocation3], 0
    %15 = vsyncpa [#allocation6], 0
    %16 = vsyncpa [#allocation4], 0
    // Predicated region
    $region2: #{tpu_custom_call.1} parent=1 // pred_check
      _
    $region3: #{tpu_custom_call.1} parent=1 // pred_check_branch
      %18 = sbr.rel (0) target = $region5
    $region4: #{tpu_custom_call.1} parent=1 // pred_region
      %s20 = ssub.s32 128, 128
      %21 = vsyncadd [#allocation3], %s20
      %s23 = sshll.u32 [#allocation2], 4
      %s24 = int_to_ptr.vmem [resolvable:$true] %s23
      %26 = dma.hbm_to_vmem [thread:$0]  %s0, 128, %s24, [#allocation3]
    $region5: #{tpu_custom_call.1} parent=1 // pred_fallthru
      _
    // Predicated region
    $region6: #{tpu_custom_call.1} parent=1 // pred_check
      _
    $region7: #{tpu_custom_call.1} parent=1 // pred_check_branch
      %28 = sbr.rel (0) target = $region9
    $region8: #{tpu_custom_call.1} parent=1 // pred_region
      _
    $region9: #{tpu_custom_call.1} parent=1 // pred_fallthru
      _
    // Predicated region
    $region10: #{tpu_custom_call.1} parent=1 // pred_check
      _
    $region11: #{tpu_custom_call.1} parent=1 // pred_check_branch
      %30 = sbr.rel (0) target = $region13
    $region12: #{tpu_custom_call.1} parent=1 // pred_region
      _
    $region13: #{tpu_custom_call.1} parent=1 // pred_fallthru
      _
    // Predicated region
    $region14: #{tpu_custom_call.1} parent=1 // pred_check
      _
    $region15: #{tpu_custom_call.1} parent=1 // pred_check_branch
      %32 = sbr.rel (0) target = $region17
    $region16: #{tpu_custom_call.1} parent=1 // pred_region
      _
    $region17: #{tpu_custom_call.1} parent=1 // pred_fallthru
      _
    // Predicated region
    $region18: #{tpu_custom_call.1} parent=1 // pred_check
      _
    $region19: #{tpu_custom_call.1} parent=1 // pred_check_branch
      %34 = sbr.rel (0) target = $region21
    $region20: #{tpu_custom_call.1} parent=1 // pred_region
      _
    $region21: #{tpu_custom_call.1} parent=1 // pred_fallthru
      _
    // Predicated region
    $region22: #{tpu_custom_call.1} parent=1 // pred_check
      _
    $region23: #{tpu_custom_call.1} parent=1 // pred_check_branch
      %36 = sbr.rel (0) target = $region25
    $region24: #{tpu_custom_call.1} parent=1 // pred_region
      %s38 = ssub.s32 1024, 1024
      %39 = vsyncadd [#allocation6], %s38
      %s40 = sshll.u32 [#allocation5], 4
      %s41 = int_to_ptr.vmem [resolvable:$true] %s40
      %46 = dma.hbm_to_vmem [thread:$0]  %s5, 1024, %s41, [#allocation6], 64, 64, 4
    $region25: #{tpu_custom_call.1} parent=1 // pred_fallthru
      _
    // Predicated region
    $region26: #{tpu_custom_call.1} parent=1 // pred_check
      _
    $region27: #{tpu_custom_call.1} parent=1 // pred_check_branch
      %48 = sbr.rel (0) target = $region29
    $region28: #{tpu_custom_call.1} parent=1 // pred_region
      _
    $region29: #{tpu_custom_call.1} parent=1 // pred_fallthru
      _
    // Predicated region
    $region30: #{tpu_custom_call.1} parent=1 // pred_check
      _
    $region31: #{tpu_custom_call.1} parent=1 // pred_check_branch
      %50 = sbr.rel (0) target = $region33
    $region32: #{tpu_custom_call.1} parent=1 // pred_region
      _
    $region33: #{tpu_custom_call.1} parent=1 // pred_fallthru
      _
    // Predicated region
    $region34: #{tpu_custom_call.1} parent=1 // pred_check
      _
    $region35: #{tpu_custom_call.1} parent=1 // pred_check_branch
      %52 = sbr.rel (0) target = $region37
    $region36: #{tpu_custom_call.1} parent=1 // pred_region
      _
    $region37: #{tpu_custom_call.1} parent=1 // pred_fallthru
      _
    // Predicated region
    $region38: #{tpu_custom_call.1} parent=1 // pred_check
      _
    $region39: #{tpu_custom_call.1} parent=1 // pred_check_branch
      %54 = sbr.rel (0) target = $region41
    $region40: #{tpu_custom_call.1} parent=1 // pred_region
      %55 = dma.done [#allocation3], 128
    $region41: #{tpu_custom_call.1} parent=1 // pred_fallthru
      _
    // Predicated region
    $region42: #{tpu_custom_call.1} parent=1 // pred_check
      _
    $region43: #{tpu_custom_call.1} parent=1 // pred_check_branch
      %57 = sbr.rel (0) target = $region45
    $region44: #{tpu_custom_call.1} parent=1 // pred_region
      %58 = dma.done [#allocation6], 1024
    $region45: #{tpu_custom_call.1} parent=1 // pred_fallthru
      _
    %v60 = vld [vmem:[#allocation2] sm:$0xff]
    %v61 = vpack.c.bf16 %v60, %v60
    %v62 = vld [vmem:[%s1] sm:$0xf]
    %v63 = vld [vmem:[%s1 + $0x4] sm:$0xf]
    %v64 = vld [vmem:[%s1 + $0x8] sm:$0xf]
    %v65 = vld [vmem:[%s1 + $0xc] sm:$0xf]
    %v66 = vld [vmem:[%s2] sm:$0x1]
    %v68 = vlaneseq
    %v69 = vshrl.u32 %v68, 7
    %v70 = vsub.s32 0, %v69
    %v71 = vrot.slane %v66, %v70
    %v77 = vunpack.c.l.b16 %v62
    %v78 = vunpack.c.l.b16 %v63
    %v79 = vunpack.c.l.b16 %v64
    %v80 = vunpack.c.l.b16 %v65
    %v81 = vpack.c.b16 %v78, %v77
    %v82 = vpack.c.b16 %v80, %v79
    %vm85 = vcmask 261120
    %v87 = vsel %vm85, %v61, 0
    %89 = vmatprep.subr.bf16.mxu0 0
    %90 = vmatpush1.bf16.msra.mxu0 %v81
    %91 = vmatprep.subr.bf16.mxu0 0
    %92 = vmatpush1.bf16.msra.mxu0 %v82
    %93 = vmatprep.subr.bf16.mxu0 0
    %94 = vmatpush1.bf16.msra.mxu0 0
    %95 = vmatprep.subr.bf16.mxu0 0
    %96 = vmatpush1.bf16.msra.mxu0 0
    %97 = vmatprep.subr.bf16.mxu0 0
    %98 = vmatpush1.bf16.msra.mxu0 0
    %99 = vmatprep.subr.bf16.mxu0 0
    %100 = vmatpush1.bf16.msra.mxu0 0
    %101 = vmatprep.subr.bf16.mxu0 0
    %102 = vmatpush1.bf16.msra.mxu0 0
    %103 = vmatprep.subr.bf16.mxu0 0
    %104 = vmatpush1.bf16.msra.mxu0 0
    %105 = vmatprep.subr.bf16.mxu0 0
    %106 = vmatpush1.bf16.msra.mxu0 0
    %107 = vmatprep.subr.bf16.mxu0 0
    %108 = vmatpush1.bf16.msra.mxu0 0
    %109 = vmatprep.subr.bf16.mxu0 0
    %110 = vmatpush1.bf16.msra.mxu0 0
    %111 = vmatprep.subr.bf16.mxu0 0
    %112 = vmatpush1.bf16.msra.mxu0 0
    %113 = vmatprep.subr.bf16.mxu0 0
    %114 = vmatpush1.bf16.msra.mxu0 0
    %115 = vmatprep.subr.bf16.mxu0 0
    %116 = vmatpush1.bf16.msra.mxu0 0
    %117 = vmatprep.subr.bf16.mxu0 0
    %118 = vmatpush1.bf16.msra.mxu0 0
    %119 = vmatprep.subr.bf16.mxu0 0
    %120 = vmatpush1.bf16.msra.mxu0 0
    %121 = vmatprep.mubr.bf16.mxu0 0
    %122 = vmatmul.mubr.bf16.gmra.mrb[0].mxu0 %v87
    %v123 = vpop.f32.mrb[0].mxu0
    %v124 = vadd.f32 %v71, %v123
    %v125 = vpop.f32.mrb[0].mxu0
    %v126 = vpop.f32.mrb[0].mxu0
    %v127 = vpop.f32.mrb[0].mxu0
    %128 = vdwg.mxu0
    %v129 = vmax.f32 %v124, 0.0
    %v130 = vpack.c.bf16 %v129, %v129
    %v131 = vld [vmem:[%s3] sm:$0xf]
    %v132 = vld [vmem:[%s3 + $0x4] sm:$0xf]
    %v133 = vld [vmem:[%s3 + $0x8] sm:$0xf]
    %v134 = vld [vmem:[%s3 + $0xc] sm:$0xf]
    %v135 = vld [vmem:[%s3 + $0x10] sm:$0xf]
    %v136 = vld [vmem:[%s3 + $0x14] sm:$0xf]
    %v137 = vld [vmem:[%s3 + $0x18] sm:$0xf]
    %v138 = vld [vmem:[%s3 + $0x1c] sm:$0xf]
    %v139 = vld [vmem:[%s3 + $0x20] sm:$0xf]
    %v140 = vld [vmem:[%s3 + $0x24] sm:$0xf]
    %v141 = vld [vmem:[%s3 + $0x28] sm:$0xf]
    %v142 = vld [vmem:[%s3 + $0x2c] sm:$0xf]
    %v143 = vld [vmem:[%s3 + $0x30] sm:$0xf]
    %v144 = vld [vmem:[%s3 + $0x34] sm:$0xf]
    %v145 = vld [vmem:[%s3 + $0x38] sm:$0xf]
    %v146 = vld [vmem:[%s3 + $0x3c] sm:$0xf]
    %v147 = vld [vmem:[%s4] sm:$0x1]
    %v149 = vlaneseq
    %v150 = vshrl.u32 %v149, 7
    %v151 = vsub.s32 0, %v150
    %v152 = vrot.slane %v147, %v151
    %v170 = vunpack.c.l.b16 %v131
    %v171 = vunpack.c.l.b16 %v132
    %v172 = vunpack.c.l.b16 %v133
    %v173 = vunpack.c.l.b16 %v134
    %v174 = vunpack.c.l.b16 %v135
    %v175 = vunpack.c.l.b16 %v136
    %v176 = vunpack.c.l.b16 %v137
    %v177 = vunpack.c.l.b16 %v138
    %v178 = vunpack.c.l.b16 %v139
    %v179 = vunpack.c.l.b16 %v140
    %v180 = vunpack.c.l.b16 %v141
    %v181 = vunpack.c.l.b16 %v142
    %v182 = vunpack.c.l.b16 %v143
    %v183 = vunpack.c.l.b16 %v144
    %v184 = vunpack.c.l.b16 %v145
    %v185 = vunpack.c.l.b16 %v146
    %v186 = vpack.c.b16 %v171, %v170
    %v187 = vpack.c.b16 %v173, %v172
    %v188 = vpack.c.b16 %v175, %v174
    %v189 = vpack.c.b16 %v177, %v176
    %v190 = vpack.c.b16 %v179, %v178
    %v191 = vpack.c.b16 %v181, %v180
    %v192 = vpack.c.b16 %v183, %v182
    %v193 = vpack.c.b16 %v185, %v184
    %202 = vmatprep.subr.bf16.mxu0 0
    %203 = vmatpush1.bf16.msra.mxu0 %v186
    %204 = vmatprep.subr.bf16.mxu0 0
    %205 = vmatpush1.bf16.msra.mxu0 %v187
    %206 = vmatprep.subr.bf16.mxu0 0
    %207 = vmatpush1.bf16.msra.mxu0 %v188
    %208 = vmatprep.subr.bf16.mxu0 0
    %209 = vmatpush1.bf16.msra.mxu0 %v189
    %210 = vmatprep.subr.bf16.mxu0 0
    %211 = vmatpush1.bf16.msra.mxu0 %v190
    %212 = vmatprep.subr.bf16.mxu0 0
    %213 = vmatpush1.bf16.msra.mxu0 %v191
    %214 = vmatprep.subr.bf16.mxu0 0
    %215 = vmatpush1.bf16.msra.mxu0 %v192
    %216 = vmatprep.subr.bf16.mxu0 0
    %217 = vmatpush1.bf16.msra.mxu0 %v193
    %218 = vmatprep.subr.bf16.mxu0 0
    %219 = vmatpush1.bf16.msra.mxu0 0
    %220 = vmatprep.subr.bf16.mxu0 0
    %221 = vmatpush1.bf16.msra.mxu0 0
    %222 = vmatprep.subr.bf16.mxu0 0
    %223 = vmatpush1.bf16.msra.mxu0 0
    %224 = vmatprep.subr.bf16.mxu0 0
    %225 = vmatpush1.bf16.msra.mxu0 0
    %226 = vmatprep.subr.bf16.mxu0 0
    %227 = vmatpush1.bf16.msra.mxu0 0
    %228 = vmatprep.subr.bf16.mxu0 0
    %229 = vmatpush1.bf16.msra.mxu0 0
    %230 = vmatprep.subr.bf16.mxu0 0
    %231 = vmatpush1.bf16.msra.mxu0 0
    %232 = vmatprep.subr.bf16.mxu0 0
    %233 = vmatpush1.bf16.msra.mxu0 0
    %234 = vmatprep.mubr.bf16.mxu0 0
    %235 = vmatmul.mubr.bf16.gmra.mrb[0].mxu0 %v130
    %v236 = vpop.f32.mrb[0].mxu0
    %v237 = vadd.f32 %v152, %v236
    %v238 = vpop.f32.mrb[0].mxu0
    %v239 = vpop.f32.mrb[0].mxu0
    %v240 = vpop.f32.mrb[0].mxu0
    %241 = vdwg.mxu0
    %v242 = vmax.f32 %v237, 0.0
    %v243 = vpack.c.bf16 %v242, %v242
    %v244 = vld [vmem:[#allocation5] sm:$0xf]
    %v245 = vld [vmem:[#allocation5 + $0x4] sm:$0xf]
    %v246 = vld [vmem:[#allocation5 + $0x8] sm:$0xf]
    %v247 = vld [vmem:[#allocation5 + $0xc] sm:$0xf]
    %v248 = vld [vmem:[#allocation5 + $0x10] sm:$0xf]
    %v249 = vld [vmem:[#allocation5 + $0x14] sm:$0xf]
    %v250 = vld [vmem:[#allocation5 + $0x18] sm:$0xf]
    %v251 = vld [vmem:[#allocation5 + $0x1c] sm:$0xf]
    %v252 = vld [vmem:[#allocation5 + $0x20] sm:$0xf]
    %v253 = vld [vmem:[#allocation5 + $0x24] sm:$0xf]
    %v254 = vld [vmem:[#allocation5 + $0x28] sm:$0xf]
    %v255 = vld [vmem:[#allocation5 + $0x2c] sm:$0xf]
    %v256 = vld [vmem:[#allocation5 + $0x30] sm:$0xf]
    %v257 = vld [vmem:[#allocation5 + $0x34] sm:$0xf]
    %v258 = vld [vmem:[#allocation5 + $0x38] sm:$0xf]
    %v259 = vld [vmem:[#allocation5 + $0x3c] sm:$0xf]
    %v260 = vld [vmem:[%s6] sm:$0x1]
    %v262 = vlaneseq
    %v263 = vshrl.u32 %v262, 7
    %v264 = vsub.s32 0, %v263
    %v265 = vrot.slane %v260, %v264
    %v283 = vunpack.c.l.b16 %v244
    %v284 = vunpack.c.l.b16 %v245
    %v285 = vunpack.c.l.b16 %v246
    %v286 = vunpack.c.l.b16 %v247
    %v287 = vunpack.c.l.b16 %v248
    %v288 = vunpack.c.l.b16 %v249
    %v289 = vunpack.c.l.b16 %v250
    %v290 = vunpack.c.l.b16 %v251
    %v291 = vunpack.c.l.b16 %v252
    %v292 = vunpack.c.l.b16 %v253
    %v293 = vunpack.c.l.b16 %v254
    %v294 = vunpack.c.l.b16 %v255
    %v295 = vunpack.c.l.b16 %v256
    %v296 = vunpack.c.l.b16 %v257
    %v297 = vunpack.c.l.b16 %v258
    %v298 = vunpack.c.l.b16 %v259
    %v299 = vpack.c.b16 %v284, %v283
    %v300 = vpack.c.b16 %v286, %v285
    %v301 = vpack.c.b16 %v288, %v287
    %v302 = vpack.c.b16 %v290, %v289
    %v303 = vpack.c.b16 %v292, %v291
    %v304 = vpack.c.b16 %v294, %v293
    %v305 = vpack.c.b16 %v296, %v295
    %v306 = vpack.c.b16 %v298, %v297
    %315 = vmatprep.subr.bf16.mxu0 0
    %316 = vmatpush1.bf16.msra.mxu0 %v299
    %317 = vmatprep.subr.bf16.mxu0 0
    %318 = vmatpush1.bf16.msra.mxu0 %v300
    %319 = vmatprep.subr.bf16.mxu0 0
    %320 = vmatpush1.bf16.msra.mxu0 %v301
    %321 = vmatprep.subr.bf16.mxu0 0
    %322 = vmatpush1.bf16.msra.mxu0 %v302
    %323 = vmatprep.subr.bf16.mxu0 0
    %324 = vmatpush1.bf16.msra.mxu0 %v303
    %325 = vmatprep.subr.bf16.mxu0 0
    %326 = vmatpush1.bf16.msra.mxu0 %v304
    %327 = vmatprep.subr.bf16.mxu0 0
    %328 = vmatpush1.bf16.msra.mxu0 %v305
    %329 = vmatprep.subr.bf16.mxu0 0
    %330 = vmatpush1.bf16.msra.mxu0 %v306
    %331 = vmatprep.subr.bf16.mxu0 0
    %332 = vmatpush1.bf16.msra.mxu0 0
    %333 = vmatprep.subr.bf16.mxu0 0
    %334 = vmatpush1.bf16.msra.mxu0 0
    %335 = vmatprep.subr.bf16.mxu0 0
    %336 = vmatpush1.bf16.msra.mxu0 0
    %337 = vmatprep.subr.bf16.mxu0 0
    %338 = vmatpush1.bf16.msra.mxu0 0
    %339 = vmatprep.subr.bf16.mxu0 0
    %340 = vmatpush1.bf16.msra.mxu0 0
    %341 = vmatprep.subr.bf16.mxu0 0
    %342 = vmatpush1.bf16.msra.mxu0 0
    %343 = vmatprep.subr.bf16.mxu0 0
    %344 = vmatpush1.bf16.msra.mxu0 0
    %345 = vmatprep.subr.bf16.mxu0 0
    %346 = vmatpush1.bf16.msra.mxu0 0
    %347 = vmatprep.mubr.bf16.mxu0 0
    %348 = vmatmul.mubr.bf16.gmra.mrb[0].mxu0 %v243
    %v349 = vpop.f32.mrb[0].mxu0
    %v350 = vadd.f32 %v265, %v349
    %v351 = vpop.f32.mrb[0].mxu0
    %v352 = vpop.f32.mrb[0].mxu0
    %v353 = vpop.f32.mrb[0].mxu0
    %354 = vdwg.mxu0
    %v355 = vmax.f32 %v350, 0.0
    %v356 = vpack.c.bf16 %v355, %v355
    %v357 = vld [vmem:[%s7] sm:$0xf]
    %v358 = vld [vmem:[%s7 + $0x4] sm:$0xf]
    %v359 = vld [vmem:[%s7 + $0x8] sm:$0xf]
    %v360 = vld [vmem:[%s7 + $0xc] sm:$0xf]
    %v361 = vld [vmem:[%s7 + $0x10] sm:$0xf]
    %v362 = vld [vmem:[%s7 + $0x14] sm:$0xf]
    %v363 = vld [vmem:[%s7 + $0x18] sm:$0xf]
    %v364 = vld [vmem:[%s7 + $0x1c] sm:$0xf]
    %v365 = vld [vmem:[%s7 + $0x20] sm:$0xf]
    %v366 = vld [vmem:[%s7 + $0x24] sm:$0xf]
    %v367 = vld [vmem:[%s7 + $0x28] sm:$0xf]
    %v368 = vld [vmem:[%s7 + $0x2c] sm:$0xf]
    %v369 = vld [vmem:[%s7 + $0x30] sm:$0xf]
    %v370 = vld [vmem:[%s7 + $0x34] sm:$0xf]
    %v371 = vld [vmem:[%s7 + $0x38] sm:$0xf]
    %v372 = vld [vmem:[%s7 + $0x3c] sm:$0xf]
    %v373 = vld [vmem:[%s8] sm:$0x1]
    %v375 = vlaneseq
    %v376 = vshrl.u32 %v375, 7
    %v377 = vsub.s32 0, %v376
    %v378 = vrot.slane %v373, %v377
    %v396 = vunpack.c.l.b16 %v357
    %v397 = vunpack.c.l.b16 %v358
    %v398 = vunpack.c.l.b16 %v359
    %v399 = vunpack.c.l.b16 %v360
    %v400 = vunpack.c.l.b16 %v361
    %v401 = vunpack.c.l.b16 %v362
    %v402 = vunpack.c.l.b16 %v363
    %v403 = vunpack.c.l.b16 %v364
    %v404 = vunpack.c.l.b16 %v365
    %v405 = vunpack.c.l.b16 %v366
    %v406 = vunpack.c.l.b16 %v367
    %v407 = vunpack.c.l.b16 %v368
    %v408 = vunpack.c.l.b16 %v369
    %v409 = vunpack.c.l.b16 %v370
    %v410 = vunpack.c.l.b16 %v371
    %v411 = vunpack.c.l.b16 %v372
    %v412 = vpack.c.b16 %v397, %v396
    %v413 = vpack.c.b16 %v399, %v398
    %v414 = vpack.c.b16 %v401, %v400
    %v415 = vpack.c.b16 %v403, %v402
    %v416 = vpack.c.b16 %v405, %v404
    %v417 = vpack.c.b16 %v407, %v406
    %v418 = vpack.c.b16 %v409, %v408
    %v419 = vpack.c.b16 %v411, %v410
    %428 = vmatprep.subr.bf16.mxu0 0
    %429 = vmatpush1.bf16.msra.mxu0 %v412
    %430 = vmatprep.subr.bf16.mxu0 0
    %431 = vmatpush1.bf16.msra.mxu0 %v413
    %432 = vmatprep.subr.bf16.mxu0 0
    %433 = vmatpush1.bf16.msra.mxu0 %v414
    %434 = vmatprep.subr.bf16.mxu0 0
    %435 = vmatpush1.bf16.msra.mxu0 %v415
    %436 = vmatprep.subr.bf16.mxu0 0
    %437 = vmatpush1.bf16.msra.mxu0 %v416
    %438 = vmatprep.subr.bf16.mxu0 0
    %439 = vmatpush1.bf16.msra.mxu0 %v417
    %440 = vmatprep.subr.bf16.mxu0 0
    %441 = vmatpush1.bf16.msra.mxu0 %v418
    %442 = vmatprep.subr.bf16.mxu0 0
    %443 = vmatpush1.bf16.msra.mxu0 %v419
    %444 = vmatprep.subr.bf16.mxu0 0
    %445 = vmatpush1.bf16.msra.mxu0 0
    %446 = vmatprep.subr.bf16.mxu0 0
    %447 = vmatpush1.bf16.msra.mxu0 0
    %448 = vmatprep.subr.bf16.mxu0 0
    %449 = vmatpush1.bf16.msra.mxu0 0
    %450 = vmatprep.subr.bf16.mxu0 0
    %451 = vmatpush1.bf16.msra.mxu0 0
    %452 = vmatprep.subr.bf16.mxu0 0
    %453 = vmatpush1.bf16.msra.mxu0 0
    %454 = vmatprep.subr.bf16.mxu0 0
    %455 = vmatpush1.bf16.msra.mxu0 0
    %456 = vmatprep.subr.bf16.mxu0 0
    %457 = vmatpush1.bf16.msra.mxu0 0
    %458 = vmatprep.subr.bf16.mxu0 0
    %459 = vmatpush1.bf16.msra.mxu0 0
    %460 = vmatprep.mubr.bf16.mxu0 0
    %461 = vmatmul.mubr.bf16.gmra.mrb[0].mxu0 %v356
    %v462 = vpop.f32.mrb[0].mxu0
    %v463 = vadd.f32 %v378, %v462
    %v464 = vpop.f32.mrb[0].mxu0
    %v465 = vpop.f32.mrb[0].mxu0
    %v466 = vpop.f32.mrb[0].mxu0
    %467 = vdwg.mxu0
    %vm468 = vcmask 130048
    %469 = vst.msk [vmem:[#allocation7] sm:$0xff] %vm468, %v463
    // Predicated region
    $region46: #{tpu_custom_call.1} parent=1 // pred_check
      _
    $region47: #{tpu_custom_call.1} parent=1 // pred_check_branch
      %471 = sbr.rel (0) target = $region49
    $region48: #{tpu_custom_call.1} parent=1 // pred_region
      %s473 = ssub.s32 128, 128
      %474 = vsyncadd [#allocation4], %s473
      %s476 = sshll.u32 [#allocation7], 4
      %s477 = int_to_ptr.vmem [resolvable:$true] %s476
      %479 = dma.vmem_to_hbm [thread:$0]  %s477, 128, %s9, [#allocation4]
    $region49: #{tpu_custom_call.1} parent=1 // pred_fallthru
      _
    // Predicated region
    $region50: #{tpu_custom_call.1} parent=1 // pred_check
      _
    $region51: #{tpu_custom_call.1} parent=1 // pred_check_branch
      %481 = sbr.rel (0) target = $region53
    $region52: #{tpu_custom_call.1} parent=1 // pred_region
      %482 = dma.done [#allocation4], 128
    $region53: #{tpu_custom_call.1} parent=1 // pred_fallthru
      _
    %483 = vsyncpa [#allocation3], 1
    %484 = vsyncpa [#allocation6], 1
    %485 = vsyncpa [#allocation4], 1

</llo_original>
